<compile_context>
chip_gen: v7x
topology: tpu7x:2x2x1
jax: 0.10.0
libtpu: 0.0.40
codegen_flags: <defaults>
</compile_context>

<pallas_src>
import jax
import jax.numpy as jnp
from jax.experimental import pallas as pl
from jax.experimental.pallas import tpu as pltpu

_LANE = 128


def _round_up(x, m):
    return ((x + m - 1) // m) * m


def mnist_mlp_kernel(x_ref, w1_ref, b1_ref, w2_ref, b2_ref, w3_ref, b3_ref, o_ref):
    # Layer 1: Linear(784->896 padded, 128) + ReLU. bf16 MXU inputs, f32 acc.
    h1 = jnp.dot(x_ref[...], w1_ref[...], preferred_element_type=jnp.float32)
    h1 = jnp.maximum(h1 + b1_ref[...], 0.0)

    # Layer 2: Linear(128, 256) + ReLU.
    h2 = jnp.dot(h1.astype(jnp.bfloat16), w2_ref[...],
                 preferred_element_type=jnp.float32)
    h2 = jnp.maximum(h2 + b2_ref[...], 0.0)

    # Output layer: Linear(256, 10 -> padded to 128 lanes), no activation.
    out = jnp.dot(h2.astype(jnp.bfloat16), w3_ref[...],
                  preferred_element_type=jnp.float32)
    o_ref[...] = (out + b3_ref[...]).astype(o_ref.dtype)


def mnist_nn_forward(x, params, *, batch_tile=1024):
    """x: (B, 784) float32; params: dict with w1,b1,w2,b2,w3,b3 (weights (in,out)).

    Returns (B, 10) float32 logits matching the PyTorch forward.
    """
    B, D_in = x.shape
    w1, b1 = params["w1"], params["b1"]
    w2, b2 = params["w2"], params["b2"]
    w3, b3 = params["w3"], params["b3"]
    D_h1, D_h2, D_out = w1.shape[1], w2.shape[1], w3.shape[1]

    # --- adaptive batch tile: large for throughput, shrunk for small batches ---
    bt = min(batch_tile, _round_up(B, 8))
    bt = max(8, _round_up(bt, 8))
    B_pad = _round_up(B, bt)

    # --- pad feature dim to a multiple of 128 (784 -> 896) and output to 128 ---
    D_in_p = _round_up(D_in, _LANE)
    D_out_p = _round_up(D_out, _LANE)

    x_p = jnp.zeros((B_pad, D_in_p), jnp.float32).at[:B, :D_in].set(x)
    w1_p = jnp.zeros((D_in_p, D_h1), w1.dtype).at[:D_in, :].set(w1)
    w3_p = jnp.zeros((D_h2, D_out_p), w3.dtype).at[:, :D_out].set(w3)
    b3_p = jnp.zeros((D_out_p,), b3.dtype).at[:D_out].set(b3)

    # bf16 MXU inputs; biases stay f32 (added after the f32 accumulate).
    x_bf = x_p.astype(jnp.bfloat16)
    w1_bf = w1_p.astype(jnp.bfloat16)
    w2_bf = w2.astype(jnp.bfloat16)
    w3_bf = w3_p.astype(jnp.bfloat16)

    b1r = b1.reshape(1, D_h1).astype(jnp.float32)
    b2r = b2.reshape(1, D_h2).astype(jnp.float32)
    b3r = b3_p.reshape(1, D_out_p).astype(jnp.float32)

    grid = (B_pad // bt,)

    # Note: weight/bias index_maps are constant across the grid, so their
    # blocks are resident and not re-DMA'd per step (default buffering kept
    # for compatibility; total weight footprint is < 1 MiB in bf16).
    out_p = pl.pallas_call(
        mnist_mlp_kernel,
        out_shape=jax.ShapeDtypeStruct((B_pad, D_out_p), jnp.float32),
        grid_spec=pltpu.PrefetchScalarGridSpec(
            num_scalar_prefetch=0,
            grid=grid,
            in_specs=[
                pl.BlockSpec((bt, D_in_p), lambda i: (i, 0)),      # x tile (bf16)
                pl.BlockSpec((D_in_p, D_h1), lambda i: (0, 0)),    # w1 (whole)
                pl.BlockSpec((1, D_h1), lambda i: (0, 0)),         # b1
                pl.BlockSpec((D_h1, D_h2), lambda i: (0, 0)),      # w2
                pl.BlockSpec((1, D_h2), lambda i: (0, 0)),         # b2
                pl.BlockSpec((D_h2, D_out_p), lambda i: (0, 0)),   # w3 (padded)
                pl.BlockSpec((1, D_out_p), lambda i: (0, 0)),      # b3 (padded)
            ],
            out_specs=pl.BlockSpec((bt, D_out_p), lambda i: (i, 0)),
        ),
        compiler_params=pltpu.CompilerParams(
            dimension_semantics=("parallel",),
            vmem_limit_bytes=48 * 1024 * 1024,  # safe on v5e/v6e/v7x, above defaults
        ),
    )(x_bf, w1_bf, b1r, w2_bf, b2r, w3_bf, b3r)

    # Strip batch padding and the zero-padded output lanes.
    return out_p[:B, :D_out]


def init_params(key):
    """Deterministic synthetic parameters with the shapes implied by Mnist_NN."""
    k1, k2, k3, k4, k5, k6 = jax.random.split(key, 6)
    # Stored as (in_features, out_features) == PyTorch weight.T
    w1 = jax.random.normal(k1, (784, 128), jnp.float32) * 0.05
    b1 = jax.random.normal(k2, (128,), jnp.float32) * 0.05
    w2 = jax.random.normal(k3, (128, 256), jnp.float32) * 0.05
    b2 = jax.random.normal(k4, (256,), jnp.float32) * 0.05
    w3 = jax.random.normal(k5, (256, 10), jnp.float32) * 0.05
    b3 = jax.random.normal(k6, (10,), jnp.float32) * 0.05
    return {"w1": w1, "b1": b1, "w2": w2, "b2": b2, "w3": w3, "b3": b3}


if __name__ == "__main__":
    key = jax.random.PRNGKey(0)
    pkey, xkey = jax.random.split(key)
    params = init_params(pkey)

    B = 64  # small test batch; wrapper pads/tiles automatically
    x = jax.random.normal(xkey, (B, 784), jnp.float32)

    out = mnist_nn_forward(x, params)  # default batch_tile=1024 adapts down to 64
    out = jax.block_until_ready(out)

    # Pure-JAX f32 reference (same semantics as the PyTorch forward).
    h1 = jnp.maximum(x @ params["w1"] + params["b1"], 0.0)
    h2 = jnp.maximum(h1 @ params["w2"] + params["b2"], 0.0)
    ref = h2 @ params["w3"] + params["b3"]

    assert out.shape == (B, 10)
    # bf16 MXU inputs -> relaxed tolerance vs the f32 reference.
    assert jnp.allclose(out, ref, atol=5e-2, rtol=5e-2), (
        f"max abs err {jnp.max(jnp.abs(out - ref))}"
    )

    print("KERNEL_OK")
</pallas_src>

<mosaic_0001>
module attributes {stable_mosaic.version = 11 : i64} {
  func.func @mnist_mlp_kernel(%arg0: i32, %arg1: memref<64x896xbf16, #tpu.memory_space<vmem>>, %arg2: memref<896x128xbf16, #tpu.memory_space<vmem>>, %arg3: memref<1x128xf32, #tpu.memory_space<vmem>>, %arg4: memref<128x256xbf16, #tpu.memory_space<vmem>>, %arg5: memref<1x256xf32, #tpu.memory_space<vmem>>, %arg6: memref<256x128xbf16, #tpu.memory_space<vmem>>, %arg7: memref<1x128xf32, #tpu.memory_space<vmem>>, %arg8: memref<64x128xf32, #tpu.memory_space<vmem>>) attributes {dimension_semantics = [#tpu.dimension_semantics<parallel>], iteration_bounds = array<i64: 1>, scalar_prefetch = 0 : i64, scratch_operands = 0 : i64, tpu.core_type = #tpu.core_type<tc>, window_params = [{transform_indices = @transform_0, window_bounds = array<i64: 64, 896>}, {pipeline_mode = #tpu.pipeline_mode<synchronous>, transform_indices = @transform_1, window_bounds = array<i64: 896, 128>}, {pipeline_mode = #tpu.pipeline_mode<synchronous>, transform_indices = @transform_2, window_bounds = array<i64: 1, 128>}, {pipeline_mode = #tpu.pipeline_mode<synchronous>, transform_indices = @transform_3, window_bounds = array<i64: 128, 256>}, {pipeline_mode = #tpu.pipeline_mode<synchronous>, transform_indices = @transform_4, window_bounds = array<i64: 1, 256>}, {pipeline_mode = #tpu.pipeline_mode<synchronous>, transform_indices = @transform_5, window_bounds = array<i64: 256, 128>}, {pipeline_mode = #tpu.pipeline_mode<synchronous>, transform_indices = @transform_6, window_bounds = array<i64: 1, 128>}, {transform_indices = @transform_7, window_bounds = array<i64: 64, 128>}]} {
    %c0 = arith.constant 0 : index
    %c0_0 = arith.constant 0 : index
    %0 = vector.load %arg1[%c0, %c0_0] : memref<64x896xbf16, #tpu.memory_space<vmem>>, vector<64x896xbf16>
    %c0_1 = arith.constant 0 : index
    %c0_2 = arith.constant 0 : index
    %1 = vector.load %arg2[%c0_1, %c0_2] : memref<896x128xbf16, #tpu.memory_space<vmem>>, vector<896x128xbf16>
    %cst = arith.constant dense<0.000000e+00> : vector<64x128xf32>
    %2 = tpu.matmul %0, %1, %cst {dimension_numbers = #tpu.dot_dimension_numbers<[1], [0], [0], [1], [0, 0, 1, 1], [], []>} : vector<64x896xbf16>, vector<896x128xbf16>, vector<64x128xf32> -> vector<64x128xf32>
    %c0_3 = arith.constant 0 : index
    %c0_4 = arith.constant 0 : index
    %3 = vector.load %arg3[%c0_3, %c0_4] : memref<1x128xf32, #tpu.memory_space<vmem>>, vector<1x128xf32>
    %4 = vector.broadcast %3 : vector<1x128xf32> to vector<64x128xf32>
    %5 = arith.addf %2, %4 : vector<64x128xf32>
    %cst_5 = arith.constant 0.000000e+00 : f32
    %6 = vector.broadcast %cst_5 : f32 to vector<64x128xf32>
    %7 = arith.maximumf %5, %6 : vector<64x128xf32>
    %8 = arith.truncf %7 : vector<64x128xf32> to vector<64x128xbf16>
    %c0_6 = arith.constant 0 : index
    %c0_7 = arith.constant 0 : index
    %9 = vector.load %arg4[%c0_6, %c0_7] : memref<128x256xbf16, #tpu.memory_space<vmem>>, vector<128x256xbf16>
    %cst_8 = arith.constant dense<0.000000e+00> : vector<64x256xf32>
    %10 = tpu.matmul %8, %9, %cst_8 {dimension_numbers = #tpu.dot_dimension_numbers<[1], [0], [0], [1], [0, 0, 1, 1], [], []>} : vector<64x128xbf16>, vector<128x256xbf16>, vector<64x256xf32> -> vector<64x256xf32>
    %c0_9 = arith.constant 0 : index
    %c0_10 = arith.constant 0 : index
    %11 = vector.load %arg5[%c0_9, %c0_10] : memref<1x256xf32, #tpu.memory_space<vmem>>, vector<1x256xf32>
    %12 = vector.broadcast %11 : vector<1x256xf32> to vector<64x256xf32>
    %13 = arith.addf %10, %12 : vector<64x256xf32>
    %cst_11 = arith.constant 0.000000e+00 : f32
    %14 = vector.broadcast %cst_11 : f32 to vector<64x256xf32>
    %15 = arith.maximumf %13, %14 : vector<64x256xf32>
    %16 = arith.truncf %15 : vector<64x256xf32> to vector<64x256xbf16>
    %c0_12 = arith.constant 0 : index
    %c0_13 = arith.constant 0 : index
    %17 = vector.load %arg6[%c0_12, %c0_13] : memref<256x128xbf16, #tpu.memory_space<vmem>>, vector<256x128xbf16>
    %cst_14 = arith.constant dense<0.000000e+00> : vector<64x128xf32>
    %18 = tpu.matmul %16, %17, %cst_14 {dimension_numbers = #tpu.dot_dimension_numbers<[1], [0], [0], [1], [0, 0, 1, 1], [], []>} : vector<64x256xbf16>, vector<256x128xbf16>, vector<64x128xf32> -> vector<64x128xf32>
    %c0_15 = arith.constant 0 : index
    %c0_16 = arith.constant 0 : index
    %19 = vector.load %arg7[%c0_15, %c0_16] : memref<1x128xf32, #tpu.memory_space<vmem>>, vector<1x128xf32>
    %20 = vector.broadcast %19 : vector<1x128xf32> to vector<64x128xf32>
    %21 = arith.addf %18, %20 : vector<64x128xf32>
    %c0_17 = arith.constant 0 : index
    %c0_18 = arith.constant 0 : index
    %22 = vector.load %arg8[%c0_17, %c0_18] : memref<64x128xf32, #tpu.memory_space<vmem>>, vector<64x128xf32>
    tpu.vector_store %arg8[%c0_17, %c0_18], %21 {strides = array<i32>} : memref<64x128xf32, #tpu.memory_space<vmem>>, vector<64x128xf32>,
    return
  }
  func.func @transform_0(%arg0: i32) -> (i32, i32) {
    %c0_i32 = arith.constant 0 : i32
    %c0_i32_0 = arith.constant 0 : i32
    return %arg0, %c0_i32 : i32, i32
  }
  func.func @transform_1(%arg0: i32) -> (i32, i32) {
    %c0_i32 = arith.constant 0 : i32
    %c0_i32_0 = arith.constant 0 : i32
    %c0_i32_1 = arith.constant 0 : i32
    return %c0_i32, %c0_i32_0 : i32, i32
  }
  func.func @transform_2(%arg0: i32) -> (i32, i32) {
    %c0_i32 = arith.constant 0 : i32
    %c0_i32_0 = arith.constant 0 : i32
    %c0_i32_1 = arith.constant 0 : i32
    return %c0_i32, %c0_i32_0 : i32, i32
  }
  func.func @transform_3(%arg0: i32) -> (i32, i32) {
    %c0_i32 = arith.constant 0 : i32
    %c0_i32_0 = arith.constant 0 : i32
    %c0_i32_1 = arith.constant 0 : i32
    return %c0_i32, %c0_i32_0 : i32, i32
  }
  func.func @transform_4(%arg0: i32) -> (i32, i32) {
    %c0_i32 = arith.constant 0 : i32
    %c0_i32_0 = arith.constant 0 : i32
    %c0_i32_1 = arith.constant 0 : i32
    return %c0_i32, %c0_i32_0 : i32, i32
  }
  func.func @transform_5(%arg0: i32) -> (i32, i32) {
    %c0_i32 = arith.constant 0 : i32
    %c0_i32_0 = arith.constant 0 : i32
    %c0_i32_1 = arith.constant 0 : i32
    return %c0_i32, %c0_i32_0 : i32, i32
  }
  func.func @transform_6(%arg0: i32) -> (i32, i32) {
    %c0_i32 = arith.constant 0 : i32
    %c0_i32_0 = arith.constant 0 : i32
    %c0_i32_1 = arith.constant 0 : i32
    return %c0_i32, %c0_i32_0 : i32, i32
  }
  func.func @transform_7(%arg0: i32) -> (i32, i32) {
    %c0_i32 = arith.constant 0 : i32
    %c0_i32_0 = arith.constant 0 : i32
    return %arg0, %c0_i32 : i32, i32
  }
}

</mosaic_0001>

<llo_original>
// kernel: tpu_custom_call.1
$region0: #{tpu_custom_call.1}
  #allocation0 [shape = 'u32[]', space=smem, size = 0x4, offset = 0x4, fixed_abs, tag = 'smem constant byte address 0x4 - core index']
  #allocation1 [shape = 'u32[144,128]{1,0:T(1,128)}', space=vmem, size = 0x12000, scoped, tag = 'internal scratch']
  %s0 = inlined_call_operand.hbm [shape: bf16[64,896], index: 0, kind: input, shape index: {}]
  %s1 = inlined_call_operand.hbm [shape: bf16[896,128], index: 1, kind: input, shape index: {}]
  %s2 = inlined_call_operand.vmem [shape: f32[1,128], index: 2, kind: input, shape index: {}]
  %s3 = inlined_call_operand.hbm [shape: bf16[128,256], index: 3, kind: input, shape index: {}]
  %s4 = inlined_call_operand.vmem [shape: f32[1,256], index: 4, kind: input, shape index: {}]
  %s5 = inlined_call_operand.hbm [shape: bf16[256,128], index: 5, kind: input, shape index: {}]
  %s6 = inlined_call_operand.vmem [shape: f32[1,128], index: 6, kind: input, shape index: {}]
  %s7 = inlined_call_operand.hbm [shape: f32[64,128], index: 7, kind: output, shape index: {}]
  %s8 = sld [smem:[#allocation0]]
  $region54: #{tpu_custom_call.1} parent=0
    _
  %s10 = ssub.s32 1, %s8
  %s11 = scalar_select 0, %s10, %s8
  $region1: #{tpu_custom_call.1} parent=0
    #allocation2 [shape = 'u8[114688]{0}', space=vmem, size = 0x1c000, scoped, tag = 'input window, operand 0, single buffered']
    #allocation3 [shape = 's32[1]{0}', space=sflag, size = 0x4, scoped, tag = 'scoped memory for tpu_custom_call.1']
    #allocation4 [shape = 's32[1]{0}', space=sflag, size = 0x4, scoped, tag = 'scoped memory for tpu_custom_call.1']
    #allocation5 [shape = 'u8[229376]{0}', space=vmem, size = 0x38000, scoped, tag = 'input window, operand 1, single buffered']
    #allocation6 [shape = 's32[1]{0}', space=sflag, size = 0x4, scoped, tag = 'scoped memory for tpu_custom_call.1']
    #allocation7 [shape = 'u8[65536]{0}', space=vmem, size = 0x10000, scoped, tag = 'input window, operand 3, single buffered']
    #allocation8 [shape = 'u8[65536]{0}', space=vmem, size = 0x10000, scoped, tag = 'input window, operand 5, single buffered']
    #allocation9 [shape = 's32[1]{0}', space=sflag, size = 0x4, scoped, tag = 'scoped memory for tpu_custom_call.1']
    #allocation10 [shape = 'u8[32768]{0}', space=vmem, size = 0x8000, scoped, tag = 'output window, operand 0, single buffered']
    %12 = vsyncpa [#allocation3], 0
    %13 = vsyncpa [#allocation6], 0
    %14 = vsyncpa [#allocation9], 0
    %15 = vsyncpa [#allocation4], 0
    // Predicated region
    $region2: #{tpu_custom_call.1} parent=1 // pred_check
      _
    $region3: #{tpu_custom_call.1} parent=1 // pred_check_branch
      %17 = sbr.rel (0) target = $region5
    $region4: #{tpu_custom_call.1} parent=1 // pred_region
      %s19 = ssub.s32 3584, 3584
      %20 = vsyncadd [#allocation3], %s19
      %s21 = sshll.u32 [#allocation2], 4
      %s22 = int_to_ptr.vmem [resolvable:$true] %s21
      %27 = dma.hbm_to_vmem [thread:$0]  %s0, 3584, %s22, [#allocation3], 448, 448, 28
    $region5: #{tpu_custom_call.1} parent=1 // pred_fallthru
      _
    // Predicated region
    $region6: #{tpu_custom_call.1} parent=1 // pred_check
      _
    $region7: #{tpu_custom_call.1} parent=1 // pred_check_branch
      %29 = sbr.rel (0) target = $region9
    $region8: #{tpu_custom_call.1} parent=1 // pred_region
      %s31 = ssub.s32 7168, 7168
      %32 = vsyncadd [#allocation6], %s31
      %s33 = sshll.u32 [#allocation5], 4
      %s34 = int_to_ptr.vmem [resolvable:$true] %s33
      %39 = dma.hbm_to_vmem [thread:$0]  %s1, 7168, %s34, [#allocation6], 64, 64, 4
    $region9: #{tpu_custom_call.1} parent=1 // pred_fallthru
      _
    // Predicated region
    $region10: #{tpu_custom_call.1} parent=1 // pred_check
      _
    $region11: #{tpu_custom_call.1} parent=1 // pred_check_branch
      %41 = sbr.rel (0) target = $region13
    $region12: #{tpu_custom_call.1} parent=1 // pred_region
      _
    $region13: #{tpu_custom_call.1} parent=1 // pred_fallthru
      _
    // Predicated region
    $region14: #{tpu_custom_call.1} parent=1 // pred_check
      _
    $region15: #{tpu_custom_call.1} parent=1 // pred_check_branch
      %43 = sbr.rel (0) target = $region17
    $region16: #{tpu_custom_call.1} parent=1 // pred_region
      %s45 = ssub.s32 2048, 2048
      %46 = vsyncadd [#allocation6], %s45
      %s47 = sshll.u32 [#allocation7], 4
      %s48 = int_to_ptr.vmem [resolvable:$true] %s47
      %53 = dma.hbm_to_vmem [thread:$0]  %s3, 2048, %s48, [#allocation6], 128, 128, 8
    $region17: #{tpu_custom_call.1} parent=1 // pred_fallthru
      _
    // Predicated region
    $region18: #{tpu_custom_call.1} parent=1 // pred_check
      _
    $region19: #{tpu_custom_call.1} parent=1 // pred_check_branch
      %55 = sbr.rel (0) target = $region21
    $region20: #{tpu_custom_call.1} parent=1 // pred_region
      _
    $region21: #{tpu_custom_call.1} parent=1 // pred_fallthru
      _
    // Predicated region
    $region22: #{tpu_custom_call.1} parent=1 // pred_check
      _
    $region23: #{tpu_custom_call.1} parent=1 // pred_check_branch
      %57 = sbr.rel (0) target = $region25
    $region24: #{tpu_custom_call.1} parent=1 // pred_region
      %s59 = ssub.s32 2048, 2048
      %60 = vsyncadd [#allocation9], %s59
      %s61 = sshll.u32 [#allocation8], 4
      %s62 = int_to_ptr.vmem [resolvable:$true] %s61
      %67 = dma.hbm_to_vmem [thread:$0]  %s5, 2048, %s62, [#allocation9], 64, 64, 4
    $region25: #{tpu_custom_call.1} parent=1 // pred_fallthru
      _
    // Predicated region
    $region26: #{tpu_custom_call.1} parent=1 // pred_check
      _
    $region27: #{tpu_custom_call.1} parent=1 // pred_check_branch
      %69 = sbr.rel (0) target = $region29
    $region28: #{tpu_custom_call.1} parent=1 // pred_region
      _
    $region29: #{tpu_custom_call.1} parent=1 // pred_fallthru
      _
    // Predicated region
    $region30: #{tpu_custom_call.1} parent=1 // pred_check
      _
    $region31: #{tpu_custom_call.1} parent=1 // pred_check_branch
      %71 = sbr.rel (0) target = $region33
    $region32: #{tpu_custom_call.1} parent=1 // pred_region
      %72 = dma.done [#allocation3], 3584
    $region33: #{tpu_custom_call.1} parent=1 // pred_fallthru
      _
    // Predicated region
    $region34: #{tpu_custom_call.1} parent=1 // pred_check
      _
    $region35: #{tpu_custom_call.1} parent=1 // pred_check_branch
      %74 = sbr.rel (0) target = $region37
    $region36: #{tpu_custom_call.1} parent=1 // pred_region
      %75 = dma.done [#allocation6], 7168
    $region37: #{tpu_custom_call.1} parent=1 // pred_fallthru
      _
    // Predicated region
    $region38: #{tpu_custom_call.1} parent=1 // pred_check
      _
    $region39: #{tpu_custom_call.1} parent=1 // pred_check_branch
      %77 = sbr.rel (0) target = $region41
    $region40: #{tpu_custom_call.1} parent=1 // pred_region
      %78 = dma.done [#allocation6], 2048
    $region41: #{tpu_custom_call.1} parent=1 // pred_fallthru
      _
    // Predicated region
    $region42: #{tpu_custom_call.1} parent=1 // pred_check
      _
    $region43: #{tpu_custom_call.1} parent=1 // pred_check_branch
      %80 = sbr.rel (0) target = $region45
    $region44: #{tpu_custom_call.1} parent=1 // pred_region
      %81 = dma.done [#allocation9], 2048
    $region45: #{tpu_custom_call.1} parent=1 // pred_fallthru
      _
    %v83 = vld [vmem:[#allocation2] sm:$0xff]
    %v84 = vld [vmem:[#allocation2 + $0x8] sm:$0xff]
    %v85 = vld [vmem:[#allocation2 + $0x10] sm:$0xff]
    %v86 = vld [vmem:[#allocation2 + $0x18] sm:$0xf]
    %v87 = vld [vmem:[#allocation2 + $0x1c] sm:$0xff]
    %v88 = vld [vmem:[#allocation2 + $0x24] sm:$0xff]
    %v89 = vld [vmem:[#allocation2 + $0x2c] sm:$0xff]
    %v90 = vld [vmem:[#allocation2 + $0x34] sm:$0xf]
    %v91 = vld [vmem:[#allocation2 + $0x38] sm:$0xff]
    %v92 = vld [vmem:[#allocation2 + $0x40] sm:$0xff]
    %v93 = vld [vmem:[#allocation2 + $0x48] sm:$0xff]
    %v94 = vld [vmem:[#allocation2 + $0x50] sm:$0xf]
    %v95 = vld [vmem:[#allocation2 + $0x54] sm:$0xff]
    %v96 = vld [vmem:[#allocation2 + $0x5c] sm:$0xff]
    %v97 = vld [vmem:[#allocation2 + $0x64] sm:$0xff]
    %v98 = vld [vmem:[#allocation2 + $0x6c] sm:$0xf]
    %v99 = vld [vmem:[#allocation2 + $0x70] sm:$0xff]
    %v100 = vld [vmem:[#allocation2 + $0x78] sm:$0xff]
    %v101 = vld [vmem:[#allocation2 + $0x80] sm:$0xff]
    %v102 = vld [vmem:[#allocation2 + $0x88] sm:$0xf]
    %v103 = vld [vmem:[#allocation2 + $0x8c] sm:$0xff]
    %v104 = vld [vmem:[#allocation2 + $0x94] sm:$0xff]
    %v105 = vld [vmem:[#allocation2 + $0x9c] sm:$0xff]
    %v106 = vld [vmem:[#allocation2 + $0xa4] sm:$0xf]
    %v107 = vld [vmem:[#allocation2 + $0xa8] sm:$0xff]
    %v108 = vld [vmem:[#allocation2 + $0xb0] sm:$0xff]
    %v109 = vld [vmem:[#allocation2 + $0xb8] sm:$0xff]
    %v110 = vld [vmem:[#allocation2 + $0xc0] sm:$0xf]
    %v111 = vld [vmem:[#allocation2 + $0xc4] sm:$0xff]
    %v112 = vld [vmem:[#allocation2 + $0xcc] sm:$0xff]
    %v113 = vld [vmem:[#allocation2 + $0xd4] sm:$0xff]
    %v114 = vld [vmem:[#allocation2 + $0xdc] sm:$0xf]
    %v115 = vld [vmem:[#allocation5] sm:$0xf]
    %v116 = vld [vmem:[#allocation5 + $0x4] sm:$0xf]
    %v117 = vld [vmem:[#allocation5 + $0x8] sm:$0xf]
    %v118 = vld [vmem:[#allocation5 + $0xc] sm:$0xf]
    %v119 = vld [vmem:[#allocation5 + $0x10] sm:$0xf]
    %v120 = vld [vmem:[#allocation5 + $0x14] sm:$0xf]
    %v121 = vld [vmem:[#allocation5 + $0x18] sm:$0xf]
    %v122 = vld [vmem:[#allocation5 + $0x1c] sm:$0xf]
    %v123 = vld [vmem:[#allocation5 + $0x20] sm:$0xf]
    %v124 = vld [vmem:[#allocation5 + $0x24] sm:$0xf]
    %v125 = vld [vmem:[#allocation5 + $0x28] sm:$0xf]
    %v126 = vld [vmem:[#allocation5 + $0x2c] sm:$0xf]
    %v127 = vld [vmem:[#allocation5 + $0x30] sm:$0xf]
    %v128 = vld [vmem:[#allocation5 + $0x34] sm:$0xf]
    %v129 = vld [vmem:[#allocation5 + $0x38] sm:$0xf]
    %v130 = vld [vmem:[#allocation5 + $0x3c] sm:$0xf]
    %v131 = vld [vmem:[#allocation5 + $0x40] sm:$0xf]
    %v132 = vld [vmem:[#allocation5 + $0x44] sm:$0xf]
    %v133 = vld [vmem:[#allocation5 + $0x48] sm:$0xf]
    %v134 = vld [vmem:[#allocation5 + $0x4c] sm:$0xf]
    %v135 = vld [vmem:[#allocation5 + $0x50] sm:$0xf]
    %v136 = vld [vmem:[#allocation5 + $0x54] sm:$0xf]
    %v137 = vld [vmem:[#allocation5 + $0x58] sm:$0xf]
    %v138 = vld [vmem:[#allocation5 + $0x5c] sm:$0xf]
    %v139 = vld [vmem:[#allocation5 + $0x60] sm:$0xf]
    %v140 = vld [vmem:[#allocation5 + $0x64] sm:$0xf]
    %v141 = vld [vmem:[#allocation5 + $0x68] sm:$0xf]
    %v142 = vld [vmem:[#allocation5 + $0x6c] sm:$0xf]
    %v143 = vld [vmem:[#allocation5 + $0x70] sm:$0xf]
    %v144 = vld [vmem:[#allocation5 + $0x74] sm:$0xf]
    %v145 = vld [vmem:[#allocation5 + $0x78] sm:$0xf]
    %v146 = vld [vmem:[#allocation5 + $0x7c] sm:$0xf]
    %v147 = vld [vmem:[#allocation5 + $0x80] sm:$0xf]
    %v148 = vld [vmem:[#allocation5 + $0x84] sm:$0xf]
    %v149 = vld [vmem:[#allocation5 + $0x88] sm:$0xf]
    %v150 = vld [vmem:[#allocation5 + $0x8c] sm:$0xf]
    %v151 = vld [vmem:[#allocation5 + $0x90] sm:$0xf]
    %v152 = vld [vmem:[#allocation5 + $0x94] sm:$0xf]
    %v153 = vld [vmem:[#allocation5 + $0x98] sm:$0xf]
    %v154 = vld [vmem:[#allocation5 + $0x9c] sm:$0xf]
    %v155 = vld [vmem:[#allocation5 + $0xa0] sm:$0xf]
    %v156 = vld [vmem:[#allocation5 + $0xa4] sm:$0xf]
    %v157 = vld [vmem:[#allocation5 + $0xa8] sm:$0xf]
    %v158 = vld [vmem:[#allocation5 + $0xac] sm:$0xf]
    %v159 = vld [vmem:[#allocation5 + $0xb0] sm:$0xf]
    %v160 = vld [vmem:[#allocation5 + $0xb4] sm:$0xf]
    %v161 = vld [vmem:[#allocation5 + $0xb8] sm:$0xf]
    %v162 = vld [vmem:[#allocation5 + $0xbc] sm:$0xf]
    %v163 = vld [vmem:[#allocation5 + $0xc0] sm:$0xf]
    %v164 = vld [vmem:[#allocation5 + $0xc4] sm:$0xf]
    %v165 = vld [vmem:[#allocation5 + $0xc8] sm:$0xf]
    %v166 = vld [vmem:[#allocation5 + $0xcc] sm:$0xf]
    %v167 = vld [vmem:[#allocation5 + $0xd0] sm:$0xf]
    %v168 = vld [vmem:[#allocation5 + $0xd4] sm:$0xf]
    %v169 = vld [vmem:[#allocation5 + $0xd8] sm:$0xf]
    %v170 = vld [vmem:[#allocation5 + $0xdc] sm:$0xf]
    %v171 = vld [vmem:[#allocation5 + $0xe0] sm:$0xf]
    %v172 = vld [vmem:[#allocation5 + $0xe4] sm:$0xf]
    %v173 = vld [vmem:[#allocation5 + $0xe8] sm:$0xf]
    %v174 = vld [vmem:[#allocation5 + $0xec] sm:$0xf]
    %v175 = vld [vmem:[#allocation5 + $0xf0] sm:$0xf]
    %v176 = vld [vmem:[#allocation5 + $0xf4] sm:$0xf]
    %v177 = vld [vmem:[#allocation5 + $0xf8] sm:$0xf]
    %v178 = vld [vmem:[#allocation5 + $0xfc] sm:$0xf]
    %v179 = vld [vmem:[#allocation5 + $0x100] sm:$0xf]
    %v180 = vld [vmem:[#allocation5 + $0x104] sm:$0xf]
    %v181 = vld [vmem:[#allocation5 + $0x108] sm:$0xf]
    %v182 = vld [vmem:[#allocation5 + $0x10c] sm:$0xf]
    %v183 = vld [vmem:[#allocation5 + $0x110] sm:$0xf]
    %v184 = vld [vmem:[#allocation5 + $0x114] sm:$0xf]
    %v185 = vld [vmem:[#allocation5 + $0x118] sm:$0xf]
    %v186 = vld [vmem:[#allocation5 + $0x11c] sm:$0xf]
    %v187 = vld [vmem:[#allocation5 + $0x120] sm:$0xf]
    %v188 = vld [vmem:[#allocation5 + $0x124] sm:$0xf]
    %v189 = vld [vmem:[#allocation5 + $0x128] sm:$0xf]
    %v190 = vld [vmem:[#allocation5 + $0x12c] sm:$0xf]
    %v191 = vld [vmem:[#allocation5 + $0x130] sm:$0xf]
    %v192 = vld [vmem:[#allocation5 + $0x134] sm:$0xf]
    %v193 = vld [vmem:[#allocation5 + $0x138] sm:$0xf]
    %v194 = vld [vmem:[#allocation5 + $0x13c] sm:$0xf]
    %v195 = vld [vmem:[#allocation5 + $0x140] sm:$0xf]
    %v196 = vld [vmem:[#allocation5 + $0x144] sm:$0xf]
    %v197 = vld [vmem:[#allocation5 + $0x148] sm:$0xf]
    %v198 = vld [vmem:[#allocation5 + $0x14c] sm:$0xf]
    %v199 = vld [vmem:[#allocation5 + $0x150] sm:$0xf]
    %v200 = vld [vmem:[#allocation5 + $0x154] sm:$0xf]
    %v201 = vld [vmem:[#allocation5 + $0x158] sm:$0xf]
    %v202 = vld [vmem:[#allocation5 + $0x15c] sm:$0xf]
    %v203 = vld [vmem:[#allocation5 + $0x160] sm:$0xf]
    %v204 = vld [vmem:[#allocation5 + $0x164] sm:$0xf]
    %v205 = vld [vmem:[#allocation5 + $0x168] sm:$0xf]
    %v206 = vld [vmem:[#allocation5 + $0x16c] sm:$0xf]
    %v207 = vld [vmem:[#allocation5 + $0x170] sm:$0xf]
    %v208 = vld [vmem:[#allocation5 + $0x174] sm:$0xf]
    %v209 = vld [vmem:[#allocation5 + $0x178] sm:$0xf]
    %v210 = vld [vmem:[#allocation5 + $0x17c] sm:$0xf]
    %v211 = vld [vmem:[#allocation5 + $0x180] sm:$0xf]
    %v212 = vld [vmem:[#allocation5 + $0x184] sm:$0xf]
    %v213 = vld [vmem:[#allocation5 + $0x188] sm:$0xf]
    %v214 = vld [vmem:[#allocation5 + $0x18c] sm:$0xf]
    %v215 = vld [vmem:[#allocation5 + $0x190] sm:$0xf]
    %v216 = vld [vmem:[#allocation5 + $0x194] sm:$0xf]
    %v217 = vld [vmem:[#allocation5 + $0x198] sm:$0xf]
    %v218 = vld [vmem:[#allocation5 + $0x19c] sm:$0xf]
    %v219 = vld [vmem:[#allocation5 + $0x1a0] sm:$0xf]
    %v220 = vld [vmem:[#allocation5 + $0x1a4] sm:$0xf]
    %v221 = vld [vmem:[#allocation5 + $0x1a8] sm:$0xf]
    %v222 = vld [vmem:[#allocation5 + $0x1ac] sm:$0xf]
    %v223 = vld [vmem:[#allocation5 + $0x1b0] sm:$0xf]
    %v224 = vld [vmem:[#allocation5 + $0x1b4] sm:$0xf]
    %v225 = vld [vmem:[#allocation5 + $0x1b8] sm:$0xf]
    %v226 = vld [vmem:[#allocation5 + $0x1bc] sm:$0xf]
    %v227 = vld [vmem:[%s2] sm:$0x1]
    %v229 = vlaneseq
    %v230 = vshrl.u32 %v229, 7
    %v231 = vsub.s32 0, %v230
    %v232 = vrot.slane %v227, %v231
    %v266 = vunpack.c.l.b16 %v83
    %v267 = vunpack.c.h.b16 %v83
    %v268 = vunpack.c.l.b16 %v84
    %v269 = vunpack.c.h.b16 %v84
    %v270 = vunpack.c.l.b16 %v85
    %v271 = vunpack.c.h.b16 %v85
    %v272 = vunpack.c.l.b16 %v86
    %v273 = vunpack.c.l.b16 %v87
    %v274 = vunpack.c.h.b16 %v87
    %v275 = vunpack.c.l.b16 %v88
    %v276 = vunpack.c.h.b16 %v88
    %v277 = vunpack.c.l.b16 %v89
    %v278 = vunpack.c.h.b16 %v89
    %v279 = vunpack.c.l.b16 %v90
    %v280 = vunpack.c.l.b16 %v91
    %v281 = vunpack.c.h.b16 %v91
    %v282 = vunpack.c.l.b16 %v92
    %v283 = vunpack.c.h.b16 %v92
    %v284 = vunpack.c.l.b16 %v93
    %v285 = vunpack.c.h.b16 %v93
    %v286 = vunpack.c.l.b16 %v94
    %v287 = vunpack.c.l.b16 %v95
    %v288 = vunpack.c.h.b16 %v95
    %v289 = vunpack.c.l.b16 %v96
    %v290 = vunpack.c.h.b16 %v96
    %v291 = vunpack.c.l.b16 %v97
    %v292 = vunpack.c.h.b16 %v97
    %v293 = vunpack.c.l.b16 %v98
    %v294 = vunpack.c.l.b16 %v99
    %v295 = vunpack.c.h.b16 %v99
    %v296 = vunpack.c.l.b16 %v100
    %v297 = vunpack.c.h.b16 %v100
    %v298 = vunpack.c.l.b16 %v101
    %v299 = vunpack.c.h.b16 %v101
    %v300 = vunpack.c.l.b16 %v102
    %v301 = vunpack.c.l.b16 %v103
    %v302 = vunpack.c.h.b16 %v103
    %v303 = vunpack.c.l.b16 %v104
    %v304 = vunpack.c.h.b16 %v104
    %v305 = vunpack.c.l.b16 %v105
    %v306 = vunpack.c.h.b16 %v105
    %v307 = vunpack.c.l.b16 %v106
    %v308 = vunpack.c.l.b16 %v107
    %v309 = vunpack.c.h.b16 %v107
    %v310 = vunpack.c.l.b16 %v108
    %v311 = vunpack.c.h.b16 %v108
    %v312 = vunpack.c.l.b16 %v109
    %v313 = vunpack.c.h.b16 %v109
    %v314 = vunpack.c.l.b16 %v110
    %v315 = vunpack.c.l.b16 %v111
    %v316 = vunpack.c.h.b16 %v111
    %v317 = vunpack.c.l.b16 %v112
    %v318 = vunpack.c.h.b16 %v112
    %v319 = vunpack.c.l.b16 %v113
    %v320 = vunpack.c.h.b16 %v113
    %v321 = vunpack.c.l.b16 %v114
    %v322 = vpack.c.b16 %v273, %v266
    %v323 = vpack.c.b16 %v274, %v267
    %v324 = vpack.c.b16 %v275, %v268
    %v325 = vpack.c.b16 %v276, %v269
    %v326 = vpack.c.b16 %v277, %v270
    %v327 = vpack.c.b16 %v278, %v271
    %v328 = vpack.c.b16 %v279, %v272
    %v329 = vpack.c.b16 %v287, %v280
    %v330 = vpack.c.b16 %v288, %v281
    %v331 = vpack.c.b16 %v289, %v282
    %v332 = vpack.c.b16 %v290, %v283
    %v333 = vpack.c.b16 %v291, %v284
    %v334 = vpack.c.b16 %v292, %v285
    %v335 = vpack.c.b16 %v293, %v286
    %v336 = vpack.c.b16 %v301, %v294
    %v337 = vpack.c.b16 %v302, %v295
    %v338 = vpack.c.b16 %v303, %v296
    %v339 = vpack.c.b16 %v304, %v297
    %v340 = vpack.c.b16 %v305, %v298
    %v341 = vpack.c.b16 %v306, %v299
    %v342 = vpack.c.b16 %v307, %v300
    %v343 = vpack.c.b16 %v315, %v308
    %v344 = vpack.c.b16 %v316, %v309
    %v345 = vpack.c.b16 %v317, %v310
    %v346 = vpack.c.b16 %v318, %v311
    %v347 = vpack.c.b16 %v319, %v312
    %v348 = vpack.c.b16 %v320, %v313
    %v349 = vpack.c.b16 %v321, %v314
    %v490 = vunpack.c.l.b16 %v115
    %v491 = vunpack.c.l.b16 %v116
    %v492 = vunpack.c.l.b16 %v117
    %v493 = vunpack.c.l.b16 %v118
    %v494 = vunpack.c.l.b16 %v119
    %v495 = vunpack.c.l.b16 %v120
    %v496 = vunpack.c.l.b16 %v121
    %v497 = vunpack.c.l.b16 %v122
    %v498 = vunpack.c.l.b16 %v123
    %v499 = vunpack.c.l.b16 %v124
    %v500 = vunpack.c.l.b16 %v125
    %v501 = vunpack.c.l.b16 %v126
    %v502 = vunpack.c.l.b16 %v127
    %v503 = vunpack.c.l.b16 %v128
    %v504 = vunpack.c.l.b16 %v129
    %v505 = vunpack.c.l.b16 %v130
    %v506 = vunpack.c.l.b16 %v131
    %v507 = vunpack.c.l.b16 %v132
    %v508 = vunpack.c.l.b16 %v133
    %v509 = vunpack.c.l.b16 %v134
    %v510 = vunpack.c.l.b16 %v135
    %v511 = vunpack.c.l.b16 %v136
    %v512 = vunpack.c.l.b16 %v137
    %v513 = vunpack.c.l.b16 %v138
    %v514 = vunpack.c.l.b16 %v139
    %v515 = vunpack.c.l.b16 %v140
    %v516 = vunpack.c.l.b16 %v141
    %v517 = vunpack.c.l.b16 %v142
    %v518 = vunpack.c.l.b16 %v143
    %v519 = vunpack.c.l.b16 %v144
    %v520 = vunpack.c.l.b16 %v145
    %v521 = vunpack.c.l.b16 %v146
    %v522 = vunpack.c.l.b16 %v147
    %v523 = vunpack.c.l.b16 %v148
    %v524 = vunpack.c.l.b16 %v149
    %v525 = vunpack.c.l.b16 %v150
    %v526 = vunpack.c.l.b16 %v151
    %v527 = vunpack.c.l.b16 %v152
    %v528 = vunpack.c.l.b16 %v153
    %v529 = vunpack.c.l.b16 %v154
    %v530 = vunpack.c.l.b16 %v155
    %v531 = vunpack.c.l.b16 %v156
    %v532 = vunpack.c.l.b16 %v157
    %v533 = vunpack.c.l.b16 %v158
    %v534 = vunpack.c.l.b16 %v159
    %v535 = vunpack.c.l.b16 %v160
    %v536 = vunpack.c.l.b16 %v161
    %v537 = vunpack.c.l.b16 %v162
    %v538 = vunpack.c.l.b16 %v163
    %v539 = vunpack.c.l.b16 %v164
    %v540 = vunpack.c.l.b16 %v165
    %v541 = vunpack.c.l.b16 %v166
    %v542 = vunpack.c.l.b16 %v167
    %v543 = vunpack.c.l.b16 %v168
    %v544 = vunpack.c.l.b16 %v169
    %v545 = vunpack.c.l.b16 %v170
    %v546 = vunpack.c.l.b16 %v171
    %v547 = vunpack.c.l.b16 %v172
    %v548 = vunpack.c.l.b16 %v173
    %v549 = vunpack.c.l.b16 %v174
    %v550 = vunpack.c.l.b16 %v175
    %v551 = vunpack.c.l.b16 %v176
    %v552 = vunpack.c.l.b16 %v177
    %v553 = vunpack.c.l.b16 %v178
    %v554 = vunpack.c.l.b16 %v179
    %v555 = vunpack.c.l.b16 %v180
    %v556 = vunpack.c.l.b16 %v181
    %v557 = vunpack.c.l.b16 %v182
    %v558 = vunpack.c.l.b16 %v183
    %v559 = vunpack.c.l.b16 %v184
    %v560 = vunpack.c.l.b16 %v185
    %v561 = vunpack.c.l.b16 %v186
    %v562 = vunpack.c.l.b16 %v187
    %v563 = vunpack.c.l.b16 %v188
    %v564 = vunpack.c.l.b16 %v189
    %v565 = vunpack.c.l.b16 %v190
    %v566 = vunpack.c.l.b16 %v191
    %v567 = vunpack.c.l.b16 %v192
    %v568 = vunpack.c.l.b16 %v193
    %v569 = vunpack.c.l.b16 %v194
    %v570 = vunpack.c.l.b16 %v195
    %v571 = vunpack.c.l.b16 %v196
    %v572 = vunpack.c.l.b16 %v197
    %v573 = vunpack.c.l.b16 %v198
    %v574 = vunpack.c.l.b16 %v199
    %v575 = vunpack.c.l.b16 %v200
    %v576 = vunpack.c.l.b16 %v201
    %v577 = vunpack.c.l.b16 %v202
    %v578 = vunpack.c.l.b16 %v203
    %v579 = vunpack.c.l.b16 %v204
    %v580 = vunpack.c.l.b16 %v205
    %v581 = vunpack.c.l.b16 %v206
    %v582 = vunpack.c.l.b16 %v207
    %v583 = vunpack.c.l.b16 %v208
    %v584 = vunpack.c.l.b16 %v209
    %v585 = vunpack.c.l.b16 %v210
    %v586 = vunpack.c.l.b16 %v211
    %v587 = vunpack.c.l.b16 %v212
    %v588 = vunpack.c.l.b16 %v213
    %v589 = vunpack.c.l.b16 %v214
    %v590 = vunpack.c.l.b16 %v215
    %v591 = vunpack.c.l.b16 %v216
    %v592 = vunpack.c.l.b16 %v217
    %v593 = vunpack.c.l.b16 %v218
    %v594 = vunpack.c.l.b16 %v219
    %v595 = vunpack.c.l.b16 %v220
    %v596 = vunpack.c.l.b16 %v221
    %v597 = vunpack.c.l.b16 %v222
    %v598 = vunpack.c.l.b16 %v223
    %v599 = vunpack.c.l.b16 %v224
    %v600 = vunpack.c.l.b16 %v225
    %v601 = vunpack.c.l.b16 %v226
    %v602 = vpack.c.b16 %v491, %v490
    %v603 = vpack.c.b16 %v493, %v492
    %v604 = vpack.c.b16 %v495, %v494
    %v605 = vpack.c.b16 %v497, %v496
    %v606 = vpack.c.b16 %v499, %v498
    %v607 = vpack.c.b16 %v501, %v500
    %v608 = vpack.c.b16 %v503, %v502
    %v609 = vpack.c.b16 %v505, %v504
    %v610 = vpack.c.b16 %v507, %v506
    %v611 = vpack.c.b16 %v509, %v508
    %v612 = vpack.c.b16 %v511, %v510
    %v613 = vpack.c.b16 %v513, %v512
    %v614 = vpack.c.b16 %v515, %v514
    %v615 = vpack.c.b16 %v517, %v516
    %v616 = vpack.c.b16 %v519, %v518
    %v617 = vpack.c.b16 %v521, %v520
    %v618 = vpack.c.b16 %v523, %v522
    %v619 = vpack.c.b16 %v525, %v524
    %v620 = vpack.c.b16 %v527, %v526
    %v621 = vpack.c.b16 %v529, %v528
    %v622 = vpack.c.b16 %v531, %v530
    %v623 = vpack.c.b16 %v533, %v532
    %v624 = vpack.c.b16 %v535, %v534
    %v625 = vpack.c.b16 %v537, %v536
    %v626 = vpack.c.b16 %v539, %v538
    %v627 = vpack.c.b16 %v541, %v540
    %v628 = vpack.c.b16 %v543, %v542
    %v629 = vpack.c.b16 %v545, %v544
    %v630 = vpack.c.b16 %v547, %v546
    %v631 = vpack.c.b16 %v549, %v548
    %v632 = vpack.c.b16 %v551, %v550
    %v633 = vpack.c.b16 %v553, %v552
    %v634 = vpack.c.b16 %v555, %v554
    %v635 = vpack.c.b16 %v557, %v556
    %v636 = vpack.c.b16 %v559, %v558
    %v637 = vpack.c.b16 %v561, %v560
    %v638 = vpack.c.b16 %v563, %v562
    %v639 = vpack.c.b16 %v565, %v564
    %v640 = vpack.c.b16 %v567, %v566
    %v641 = vpack.c.b16 %v569, %v568
    %v642 = vpack.c.b16 %v571, %v570
    %v643 = vpack.c.b16 %v573, %v572
    %v644 = vpack.c.b16 %v575, %v574
    %v645 = vpack.c.b16 %v577, %v576
    %v646 = vpack.c.b16 %v579, %v578
    %v647 = vpack.c.b16 %v581, %v580
    %v648 = vpack.c.b16 %v583, %v582
    %v649 = vpack.c.b16 %v585, %v584
    %v650 = vpack.c.b16 %v587, %v586
    %v651 = vpack.c.b16 %v589, %v588
    %v652 = vpack.c.b16 %v591, %v590
    %v653 = vpack.c.b16 %v593, %v592
    %v654 = vpack.c.b16 %v595, %v594
    %v655 = vpack.c.b16 %v597, %v596
    %v656 = vpack.c.b16 %v599, %v598
    %v657 = vpack.c.b16 %v601, %v600
    %714 = vmatprep.subr.bf16.mxu0 0
    %715 = vmatpush1.bf16.msra.mxu0 %v602
    %716 = vmatprep.subr.bf16.mxu0 0
    %717 = vmatpush1.bf16.msra.mxu0 %v603
    %718 = vmatprep.subr.bf16.mxu0 0
    %719 = vmatpush1.bf16.msra.mxu0 %v604
    %720 = vmatprep.subr.bf16.mxu0 0
    %721 = vmatpush1.bf16.msra.mxu0 %v605
    %722 = vmatprep.subr.bf16.mxu0 0
    %723 = vmatpush1.bf16.msra.mxu0 %v606
    %724 = vmatprep.subr.bf16.mxu0 0
    %725 = vmatpush1.bf16.msra.mxu0 %v607
    %726 = vmatprep.subr.bf16.mxu0 0
    %727 = vmatpush1.bf16.msra.mxu0 %v608
    %728 = vmatprep.subr.bf16.mxu0 0
    %729 = vmatpush1.bf16.msra.mxu0 %v609
    %730 = vmatprep.subr.bf16.mxu0 0
    %731 = vmatpush1.bf16.msra.mxu0 %v610
    %732 = vmatprep.subr.bf16.mxu0 0
    %733 = vmatpush1.bf16.msra.mxu0 %v611
    %734 = vmatprep.subr.bf16.mxu0 0
    %735 = vmatpush1.bf16.msra.mxu0 %v612
    %736 = vmatprep.subr.bf16.mxu0 0
    %737 = vmatpush1.bf16.msra.mxu0 %v613
    %738 = vmatprep.subr.bf16.mxu0 0
    %739 = vmatpush1.bf16.msra.mxu0 %v614
    %740 = vmatprep.subr.bf16.mxu0 0
    %741 = vmatpush1.bf16.msra.mxu0 %v615
    %742 = vmatprep.subr.bf16.mxu0 0
    %743 = vmatpush1.bf16.msra.mxu0 %v616
    %744 = vmatprep.subr.bf16.mxu0 0
    %745 = vmatpush1.bf16.msra.mxu0 %v617
    %746 = vmatprep.mubr.bf16.mxu0 %v323
    %747 = vmatmul.mubr.bf16.gmra.mrb[0].mxu0 %v322
    %v748 = vpop.f32.mrb[0].mxu0
    %v749 = vadd.f32 %v232, %v748
    %v750 = vpop.f32.mrb[0].mxu0
    %v751 = vpop.f32.mrb[0].mxu0
    %v752 = vadd.f32 %v232, %v751
    %v753 = vpop.f32.mrb[0].mxu0
    %754 = vmatprep.mubr.bf16.mxu0 %v330
    %755 = vmatmul.mubr.bf16.gmra.mrb[0].mxu0 %v329
    %v756 = vpop.f32.mrb[0].mxu0
    %v757 = vadd.f32 %v232, %v756
    %v758 = vpop.f32.mrb[0].mxu0
    %v759 = vpop.f32.mrb[0].mxu0
    %v760 = vadd.f32 %v232, %v759
    %v761 = vpop.f32.mrb[0].mxu0
    %762 = vmatprep.mubr.bf16.mxu0 %v337
    %763 = vmatmul.mubr.bf16.gmra.mrb[0].mxu0 %v336
    %v764 = vpop.f32.mrb[0].mxu0
    %v765 = vadd.f32 %v232, %v764
    %v766 = vpop.f32.mrb[0].mxu0
    %v767 = vpop.f32.mrb[0].mxu0
    %v768 = vadd.f32 %v232, %v767
    %v769 = vpop.f32.mrb[0].mxu0
    %770 = vmatprep.mubr.bf16.mxu0 %v344
    %771 = vmatmul.mubr.bf16.gmra.mrb[0].mxu0 %v343
    %v772 = vpop.f32.mrb[0].mxu0
    %v773 = vadd.f32 %v232, %v772
    %v774 = vpop.f32.mrb[0].mxu0
    %v775 = vpop.f32.mrb[0].mxu0
    %v776 = vadd.f32 %v232, %v775
    %v777 = vpop.f32.mrb[0].mxu0
    %778 = vdwg.mxu0
    %779 = vmatprep.subr.bf16.mxu0 0
    %780 = vmatpush1.bf16.msra.mxu0 %v618
    %781 = vmatprep.subr.bf16.mxu0 0
    %782 = vmatpush1.bf16.msra.mxu0 %v619
    %783 = vmatprep.subr.bf16.mxu0 0
    %784 = vmatpush1.bf16.msra.mxu0 %v620
    %785 = vmatprep.subr.bf16.mxu0 0
    %786 = vmatpush1.bf16.msra.mxu0 %v621
    %787 = vmatprep.subr.bf16.mxu0 0
    %788 = vmatpush1.bf16.msra.mxu0 %v622
    %789 = vmatprep.subr.bf16.mxu0 0
    %790 = vmatpush1.bf16.msra.mxu0 %v623
    %791 = vmatprep.subr.bf16.mxu0 0
    %792 = vmatpush1.bf16.msra.mxu0 %v624
    %793 = vmatprep.subr.bf16.mxu0 0
    %794 = vmatpush1.bf16.msra.mxu0 %v625
    %795 = vmatprep.subr.bf16.mxu0 0
    %796 = vmatpush1.bf16.msra.mxu0 %v626
    %797 = vmatprep.subr.bf16.mxu0 0
    %798 = vmatpush1.bf16.msra.mxu0 %v627
    %799 = vmatprep.subr.bf16.mxu0 0
    %800 = vmatpush1.bf16.msra.mxu0 %v628
    %801 = vmatprep.subr.bf16.mxu0 0
    %802 = vmatpush1.bf16.msra.mxu0 %v629
    %803 = vmatprep.subr.bf16.mxu0 0
    %804 = vmatpush1.bf16.msra.mxu0 %v630
    %805 = vmatprep.subr.bf16.mxu0 0
    %806 = vmatpush1.bf16.msra.mxu0 %v631
    %807 = vmatprep.subr.bf16.mxu0 0
    %808 = vmatpush1.bf16.msra.mxu0 %v632
    %809 = vmatprep.subr.bf16.mxu0 0
    %810 = vmatpush1.bf16.msra.mxu0 %v633
    %811 = vmatprep.mubr.bf16.mxu0 %v325
    %812 = vmatmul.mubr.bf16.gmra.mrb[0].mxu0 %v324
    %v813 = vpop.f32.mrb[0].mxu0
    %v814 = vadd.f32 %v749, %v813
    %v815 = vpop.f32.mrb[0].mxu0
    %v816 = vpop.f32.mrb[0].mxu0
    %v817 = vadd.f32 %v752, %v816
    %v818 = vpop.f32.mrb[0].mxu0
    %819 = vmatprep.mubr.bf16.mxu0 %v332
    %820 = vmatmul.mubr.bf16.gmra.mrb[0].mxu0 %v331
    %v821 = vpop.f32.mrb[0].mxu0
    %v822 = vadd.f32 %v757, %v821
    %v823 = vpop.f32.mrb[0].mxu0
    %v824 = vpop.f32.mrb[0].mxu0
    %v825 = vadd.f32 %v760, %v824
    %v826 = vpop.f32.mrb[0].mxu0
    %827 = vmatprep.mubr.bf16.mxu0 %v339
    %828 = vmatmul.mubr.bf16.gmra.mrb[0].mxu0 %v338
    %v829 = vpop.f32.mrb[0].mxu0
    %v830 = vadd.f32 %v765, %v829
    %v831 = vpop.f32.mrb[0].mxu0
    %v832 = vpop.f32.mrb[0].mxu0
    %v833 = vadd.f32 %v768, %v832
    %v834 = vpop.f32.mrb[0].mxu0
    %835 = vmatprep.mubr.bf16.mxu0 %v346
    %836 = vmatmul.mubr.bf16.gmra.mrb[0].mxu0 %v345
    %v837 = vpop.f32.mrb[0].mxu0
    %v838 = vadd.f32 %v773, %v837
    %v839 = vpop.f32.mrb[0].mxu0
    %v840 = vpop.f32.mrb[0].mxu0
    %v841 = vadd.f32 %v776, %v840
    %v842 = vpop.f32.mrb[0].mxu0
    %843 = vdwg.mxu0
    %844 = vmatprep.subr.bf16.mxu0 0
    %845 = vmatpush1.bf16.msra.mxu0 %v634
    %846 = vmatprep.subr.bf16.mxu0 0
    %847 = vmatpush1.bf16.msra.mxu0 %v635
    %848 = vmatprep.subr.bf16.mxu0 0
    %849 = vmatpush1.bf16.msra.mxu0 %v636
    %850 = vmatprep.subr.bf16.mxu0 0
    %851 = vmatpush1.bf16.msra.mxu0 %v637
    %852 = vmatprep.subr.bf16.mxu0 0
    %853 = vmatpush1.bf16.msra.mxu0 %v638
    %854 = vmatprep.subr.bf16.mxu0 0
    %855 = vmatpush1.bf16.msra.mxu0 %v639
    %856 = vmatprep.subr.bf16.mxu0 0
    %857 = vmatpush1.bf16.msra.mxu0 %v640
    %858 = vmatprep.subr.bf16.mxu0 0
    %859 = vmatpush1.bf16.msra.mxu0 %v641
    %860 = vmatprep.subr.bf16.mxu0 0
    %861 = vmatpush1.bf16.msra.mxu0 %v642
    %862 = vmatprep.subr.bf16.mxu0 0
    %863 = vmatpush1.bf16.msra.mxu0 %v643
    %864 = vmatprep.subr.bf16.mxu0 0
    %865 = vmatpush1.bf16.msra.mxu0 %v644
    %866 = vmatprep.subr.bf16.mxu0 0
    %867 = vmatpush1.bf16.msra.mxu0 %v645
    %868 = vmatprep.subr.bf16.mxu0 0
    %869 = vmatpush1.bf16.msra.mxu0 %v646
    %870 = vmatprep.subr.bf16.mxu0 0
    %871 = vmatpush1.bf16.msra.mxu0 %v647
    %872 = vmatprep.subr.bf16.mxu0 0
    %873 = vmatpush1.bf16.msra.mxu0 %v648
    %874 = vmatprep.subr.bf16.mxu0 0
    %875 = vmatpush1.bf16.msra.mxu0 %v649
    %876 = vmatprep.mubr.bf16.mxu0 %v327
    %877 = vmatmul.mubr.bf16.gmra.mrb[0].mxu0 %v326
    %v878 = vpop.f32.mrb[0].mxu0
    %v879 = vadd.f32 %v814, %v878
    %v880 = vpop.f32.mrb[0].mxu0
    %v881 = vpop.f32.mrb[0].mxu0
    %v882 = vadd.f32 %v817, %v881
    %v883 = vpop.f32.mrb[0].mxu0
    %884 = vmatprep.mubr.bf16.mxu0 %v334
    %885 = vmatmul.mubr.bf16.gmra.mrb[0].mxu0 %v333
    %v886 = vpop.f32.mrb[0].mxu0
    %v887 = vadd.f32 %v822, %v886
    %v888 = vpop.f32.mrb[0].mxu0
    %v889 = vpop.f32.mrb[0].mxu0
    %v890 = vadd.f32 %v825, %v889
    %v891 = vpop.f32.mrb[0].mxu0
    %892 = vmatprep.mubr.bf16.mxu0 %v341
    %893 = vmatmul.mubr.bf16.gmra.mrb[0].mxu0 %v340
    %v894 = vpop.f32.mrb[0].mxu0
    %v895 = vadd.f32 %v830, %v894
    %v896 = vpop.f32.mrb[0].mxu0
    %v897 = vpop.f32.mrb[0].mxu0
    %v898 = vadd.f32 %v833, %v897
    %v899 = vpop.f32.mrb[0].mxu0
    %900 = vmatprep.mubr.bf16.mxu0 %v348
    %901 = vmatmul.mubr.bf16.gmra.mrb[0].mxu0 %v347
    %v902 = vpop.f32.mrb[0].mxu0
    %v903 = vadd.f32 %v838, %v902
    %v904 = vpop.f32.mrb[0].mxu0
    %v905 = vpop.f32.mrb[0].mxu0
    %v906 = vadd.f32 %v841, %v905
    %v907 = vpop.f32.mrb[0].mxu0
    %908 = vdwg.mxu0
    %909 = vmatprep.subr.bf16.mxu0 0
    %910 = vmatpush1.bf16.msra.mxu0 %v650
    %911 = vmatprep.subr.bf16.mxu0 0
    %912 = vmatpush1.bf16.msra.mxu0 %v651
    %913 = vmatprep.subr.bf16.mxu0 0
    %914 = vmatpush1.bf16.msra.mxu0 %v652
    %915 = vmatprep.subr.bf16.mxu0 0
    %916 = vmatpush1.bf16.msra.mxu0 %v653
    %917 = vmatprep.subr.bf16.mxu0 0
    %918 = vmatpush1.bf16.msra.mxu0 %v654
    %919 = vmatprep.subr.bf16.mxu0 0
    %920 = vmatpush1.bf16.msra.mxu0 %v655
    %921 = vmatprep.subr.bf16.mxu0 0
    %922 = vmatpush1.bf16.msra.mxu0 %v656
    %923 = vmatprep.subr.bf16.mxu0 0
    %924 = vmatpush1.bf16.msra.mxu0 %v657
    %925 = vmatprep.subr.bf16.mxu0 0
    %926 = vmatpush1.bf16.msra.mxu0 0
    %927 = vmatprep.subr.bf16.mxu0 0
    %928 = vmatpush1.bf16.msra.mxu0 0
    %929 = vmatprep.subr.bf16.mxu0 0
    %930 = vmatpush1.bf16.msra.mxu0 0
    %931 = vmatprep.subr.bf16.mxu0 0
    %932 = vmatpush1.bf16.msra.mxu0 0
    %933 = vmatprep.subr.bf16.mxu0 0
    %934 = vmatpush1.bf16.msra.mxu0 0
    %935 = vmatprep.subr.bf16.mxu0 0
    %936 = vmatpush1.bf16.msra.mxu0 0
    %937 = vmatprep.subr.bf16.mxu0 0
    %938 = vmatpush1.bf16.msra.mxu0 0
    %939 = vmatprep.subr.bf16.mxu0 0
    %940 = vmatpush1.bf16.msra.mxu0 0
    %941 = vmatprep.mubr.bf16.mxu0 0
    %942 = vmatmul.mubr.bf16.gmra.mrb[0].mxu0 %v328
    %v943 = vpop.f32.mrb[0].mxu0
    %v944 = vadd.f32 %v879, %v943
    %v945 = vpop.f32.mrb[0].mxu0
    %v946 = vpop.f32.mrb[0].mxu0
    %v947 = vadd.f32 %v882, %v946
    %v948 = vpop.f32.mrb[0].mxu0
    %949 = vmatprep.mubr.bf16.mxu0 0
    %950 = vmatmul.mubr.bf16.gmra.mrb[0].mxu0 %v335
    %v951 = vpop.f32.mrb[0].mxu0
    %v952 = vadd.f32 %v887, %v951
    %v953 = vpop.f32.mrb[0].mxu0
    %v954 = vpop.f32.mrb[0].mxu0
    %v955 = vadd.f32 %v890, %v954
    %v956 = vpop.f32.mrb[0].mxu0
    %957 = vmatprep.mubr.bf16.mxu0 0
    %958 = vmatmul.mubr.bf16.gmra.mrb[0].mxu0 %v342
    %v959 = vpop.f32.mrb[0].mxu0
    %v960 = vadd.f32 %v895, %v959
    %v961 = vpop.f32.mrb[0].mxu0
    %v962 = vpop.f32.mrb[0].mxu0
    %v963 = vadd.f32 %v898, %v962
    %v964 = vpop.f32.mrb[0].mxu0
    %965 = vmatprep.mubr.bf16.mxu0 0
    %966 = vmatmul.mubr.bf16.gmra.mrb[0].mxu0 %v349
    %v967 = vpop.f32.mrb[0].mxu0
    %v968 = vadd.f32 %v903, %v967
    %v969 = vpop.f32.mrb[0].mxu0
    %v970 = vpop.f32.mrb[0].mxu0
    %v971 = vadd.f32 %v906, %v970
    %v972 = vpop.f32.mrb[0].mxu0
    %973 = vdwg.mxu0
    %v974 = vmax.f32 %v944, 0.0
    %v975 = vmax.f32 %v947, 0.0
    %v976 = vmax.f32 %v952, 0.0
    %v977 = vmax.f32 %v955, 0.0
    %v978 = vmax.f32 %v960, 0.0
    %v979 = vmax.f32 %v963, 0.0
    %v980 = vmax.f32 %v968, 0.0
    %v981 = vmax.f32 %v971, 0.0
    %v982 = vpack.c.bf16 %v975, %v974
    %v983 = vpack.c.bf16 %v977, %v976
    %v984 = vpack.c.bf16 %v979, %v978
    %v985 = vpack.c.bf16 %v981, %v980
    %v986 = vld [vmem:[#allocation7] sm:$0xff]
    %v987 = vld [vmem:[#allocation7 + $0x8] sm:$0xff]
    %v988 = vld [vmem:[#allocation7 + $0x10] sm:$0xff]
    %v989 = vld [vmem:[#allocation7 + $0x18] sm:$0xff]
    %v990 = vld [vmem:[#allocation7 + $0x20] sm:$0xff]
    %v991 = vld [vmem:[#allocation7 + $0x28] sm:$0xff]
    %v992 = vld [vmem:[#allocation7 + $0x30] sm:$0xff]
    %v993 = vld [vmem:[#allocation7 + $0x38] sm:$0xff]
    %v994 = vld [vmem:[#allocation7 + $0x40] sm:$0xff]
    %v995 = vld [vmem:[#allocation7 + $0x48] sm:$0xff]
    %v996 = vld [vmem:[#allocation7 + $0x50] sm:$0xff]
    %v997 = vld [vmem:[#allocation7 + $0x58] sm:$0xff]
    %v998 = vld [vmem:[#allocation7 + $0x60] sm:$0xff]
    %v999 = vld [vmem:[#allocation7 + $0x68] sm:$0xff]
    %v1000 = vld [vmem:[#allocation7 + $0x70] sm:$0xff]
    %v1001 = vld [vmem:[#allocation7 + $0x78] sm:$0xff]
    %v1002 = vld [vmem:[%s4] sm:$0x3]
    %v1004 = vlaneseq
    %v1005 = vshrl.u32 %v1004, 7
    %v1006 = vsub.s32 0, %v1005
    %v1007 = vrot.slane %v1002, %v1006
    %v1008 = vlaneseq
    %v1009 = vshrl.u32 %v1008, 7
    %v1010 = vsub.s32 1, %v1009
    %v1011 = vrot.slane %v1002, %v1010
    %v1030 = vunpack.c.l.b16 %v986
    %v1031 = vunpack.c.h.b16 %v986
    %v1032 = vunpack.c.l.b16 %v987
    %v1033 = vunpack.c.h.b16 %v987
    %v1034 = vunpack.c.l.b16 %v988
    %v1035 = vunpack.c.h.b16 %v988
    %v1036 = vunpack.c.l.b16 %v989
    %v1037 = vunpack.c.h.b16 %v989
    %v1038 = vunpack.c.l.b16 %v990
    %v1039 = vunpack.c.h.b16 %v990
    %v1040 = vunpack.c.l.b16 %v991
    %v1041 = vunpack.c.h.b16 %v991
    %v1042 = vunpack.c.l.b16 %v992
    %v1043 = vunpack.c.h.b16 %v992
    %v1044 = vunpack.c.l.b16 %v993
    %v1045 = vunpack.c.h.b16 %v993
    %v1046 = vunpack.c.l.b16 %v994
    %v1047 = vunpack.c.h.b16 %v994
    %v1048 = vunpack.c.l.b16 %v995
    %v1049 = vunpack.c.h.b16 %v995
    %v1050 = vunpack.c.l.b16 %v996
    %v1051 = vunpack.c.h.b16 %v996
    %v1052 = vunpack.c.l.b16 %v997
    %v1053 = vunpack.c.h.b16 %v997
    %v1054 = vunpack.c.l.b16 %v998
    %v1055 = vunpack.c.h.b16 %v998
    %v1056 = vunpack.c.l.b16 %v999
    %v1057 = vunpack.c.h.b16 %v999
    %v1058 = vunpack.c.l.b16 %v1000
    %v1059 = vunpack.c.h.b16 %v1000
    %v1060 = vunpack.c.l.b16 %v1001
    %v1061 = vunpack.c.h.b16 %v1001
    %v1062 = vpack.c.b16 %v1032, %v1030
    %v1063 = vpack.c.b16 %v1033, %v1031
    %v1064 = vpack.c.b16 %v1036, %v1034
    %v1065 = vpack.c.b16 %v1037, %v1035
    %v1066 = vpack.c.b16 %v1040, %v1038
    %v1067 = vpack.c.b16 %v1041, %v1039
    %v1068 = vpack.c.b16 %v1044, %v1042
    %v1069 = vpack.c.b16 %v1045, %v1043
    %v1070 = vpack.c.b16 %v1048, %v1046
    %v1071 = vpack.c.b16 %v1049, %v1047
    %v1072 = vpack.c.b16 %v1052, %v1050
    %v1073 = vpack.c.b16 %v1053, %v1051
    %v1074 = vpack.c.b16 %v1056, %v1054
    %v1075 = vpack.c.b16 %v1057, %v1055
    %v1076 = vpack.c.b16 %v1060, %v1058
    %v1077 = vpack.c.b16 %v1061, %v1059
    %1094 = vmatprep.subr.bf16.mxu0 %v1063
    %1095 = vmatpush1.bf16.msra.mxu0 %v1062
    %1096 = vmatprep.subr.bf16.mxu0 %v1065
    %1097 = vmatpush1.bf16.msra.mxu0 %v1064
    %1098 = vmatprep.subr.bf16.mxu0 %v1067
    %1099 = vmatpush1.bf16.msra.mxu0 %v1066
    %1100 = vmatprep.subr.bf16.mxu0 %v1069
    %1101 = vmatpush1.bf16.msra.mxu0 %v1068
    %1102 = vmatprep.subr.bf16.mxu0 %v1071
    %1103 = vmatpush1.bf16.msra.mxu0 %v1070
    %1104 = vmatprep.subr.bf16.mxu0 %v1073
    %1105 = vmatpush1.bf16.msra.mxu0 %v1072
    %1106 = vmatprep.subr.bf16.mxu0 %v1075
    %1107 = vmatpush1.bf16.msra.mxu0 %v1074
    %1108 = vmatprep.subr.bf16.mxu0 %v1077
    %1109 = vmatpush1.bf16.msra.mxu0 %v1076
    %1110 = vmatprep.subr.bf16.mxu0 0
    %1111 = vmatpush1.bf16.msra.mxu0 0
    %1112 = vmatprep.subr.bf16.mxu0 0
    %1113 = vmatpush1.bf16.msra.mxu0 0
    %1114 = vmatprep.subr.bf16.mxu0 0
    %1115 = vmatpush1.bf16.msra.mxu0 0
    %1116 = vmatprep.subr.bf16.mxu0 0
    %1117 = vmatpush1.bf16.msra.mxu0 0
    %1118 = vmatprep.subr.bf16.mxu0 0
    %1119 = vmatpush1.bf16.msra.mxu0 0
    %1120 = vmatprep.subr.bf16.mxu0 0
    %1121 = vmatpush1.bf16.msra.mxu0 0
    %1122 = vmatprep.subr.bf16.mxu0 0
    %1123 = vmatpush1.bf16.msra.mxu0 0
    %1124 = vmatprep.subr.bf16.mxu0 0
    %1125 = vmatpush1.bf16.msra.mxu0 0
    %1126 = vmatprep.mubr.bf16.mxu0 0
    %1127 = vmatmul.mubr.bf16.gmra.mrb[0].mxu0 %v982
    %v1128 = vpop.f32.mrb[0].mxu0
    %v1129 = vadd.f32 %v1007, %v1128
    %v1130 = vpop.f32.mrb[0].mxu0
    %v1131 = vadd.f32 %v1011, %v1130
    %v1132 = vpop.f32.mrb[0].mxu0
    %v1133 = vadd.f32 %v1007, %v1132
    %v1134 = vpop.f32.mrb[0].mxu0
    %v1135 = vadd.f32 %v1011, %v1134
    %1136 = vmatprep.mubr.bf16.mxu0 0
    %1137 = vmatmul.mubr.bf16.gmra.mrb[0].mxu0 %v983
    %v1138 = vpop.f32.mrb[0].mxu0
    %v1139 = vadd.f32 %v1007, %v1138
    %v1140 = vpop.f32.mrb[0].mxu0
    %v1141 = vadd.f32 %v1011, %v1140
    %v1142 = vpop.f32.mrb[0].mxu0
    %v1143 = vadd.f32 %v1007, %v1142
    %v1144 = vpop.f32.mrb[0].mxu0
    %v1145 = vadd.f32 %v1011, %v1144
    %1146 = vmatprep.mubr.bf16.mxu0 0
    %1147 = vmatmul.mubr.bf16.gmra.mrb[0].mxu0 %v984
    %v1148 = vpop.f32.mrb[0].mxu0
    %v1149 = vadd.f32 %v1007, %v1148
    %v1150 = vpop.f32.mrb[0].mxu0
    %v1151 = vadd.f32 %v1011, %v1150
    %v1152 = vpop.f32.mrb[0].mxu0
    %v1153 = vadd.f32 %v1007, %v1152
    %v1154 = vpop.f32.mrb[0].mxu0
    %v1155 = vadd.f32 %v1011, %v1154
    %1156 = vmatprep.mubr.bf16.mxu0 0
    %1157 = vmatmul.mubr.bf16.gmra.mrb[0].mxu0 %v985
    %v1158 = vpop.f32.mrb[0].mxu0
    %v1159 = vadd.f32 %v1007, %v1158
    %v1160 = vpop.f32.mrb[0].mxu0
    %v1161 = vadd.f32 %v1011, %v1160
    %v1162 = vpop.f32.mrb[0].mxu0
    %v1163 = vadd.f32 %v1007, %v1162
    %v1164 = vpop.f32.mrb[0].mxu0
    %v1165 = vadd.f32 %v1011, %v1164
    %1166 = vdwg.mxu0
    %v1167 = vmax.f32 %v1129, 0.0
    %v1168 = vmax.f32 %v1131, 0.0
    %v1169 = vmax.f32 %v1133, 0.0
    %v1170 = vmax.f32 %v1135, 0.0
    %v1171 = vmax.f32 %v1139, 0.0
    %v1172 = vmax.f32 %v1141, 0.0
    %v1173 = vmax.f32 %v1143, 0.0
    %v1174 = vmax.f32 %v1145, 0.0
    %v1175 = vmax.f32 %v1149, 0.0
    %v1176 = vmax.f32 %v1151, 0.0
    %v1177 = vmax.f32 %v1153, 0.0
    %v1178 = vmax.f32 %v1155, 0.0
    %v1179 = vmax.f32 %v1159, 0.0
    %v1180 = vmax.f32 %v1161, 0.0
    %v1181 = vmax.f32 %v1163, 0.0
    %v1182 = vmax.f32 %v1165, 0.0
    %v1183 = vpack.c.bf16 %v1169, %v1167
    %v1184 = vpack.c.bf16 %v1170, %v1168
    %v1185 = vpack.c.bf16 %v1173, %v1171
    %v1186 = vpack.c.bf16 %v1174, %v1172
    %v1187 = vpack.c.bf16 %v1177, %v1175
    %v1188 = vpack.c.bf16 %v1178, %v1176
    %v1189 = vpack.c.bf16 %v1181, %v1179
    %v1190 = vpack.c.bf16 %v1182, %v1180
    %v1191 = vld [vmem:[#allocation8] sm:$0xf]
    %v1192 = vld [vmem:[#allocation8 + $0x4] sm:$0xf]
    %v1193 = vld [vmem:[#allocation8 + $0x8] sm:$0xf]
    %v1194 = vld [vmem:[#allocation8 + $0xc] sm:$0xf]
    %v1195 = vld [vmem:[#allocation8 + $0x10] sm:$0xf]
    %v1196 = vld [vmem:[#allocation8 + $0x14] sm:$0xf]
    %v1197 = vld [vmem:[#allocation8 + $0x18] sm:$0xf]
    %v1198 = vld [vmem:[#allocation8 + $0x1c] sm:$0xf]
    %v1199 = vld [vmem:[#allocation8 + $0x20] sm:$0xf]
    %v1200 = vld [vmem:[#allocation8 + $0x24] sm:$0xf]
    %v1201 = vld [vmem:[#allocation8 + $0x28] sm:$0xf]
    %v1202 = vld [vmem:[#allocation8 + $0x2c] sm:$0xf]
    %v1203 = vld [vmem:[#allocation8 + $0x30] sm:$0xf]
    %v1204 = vld [vmem:[#allocation8 + $0x34] sm:$0xf]
    %v1205 = vld [vmem:[#allocation8 + $0x38] sm:$0xf]
    %v1206 = vld [vmem:[#allocation8 + $0x3c] sm:$0xf]
    %v1207 = vld [vmem:[#allocation8 + $0x40] sm:$0xf]
    %v1208 = vld [vmem:[#allocation8 + $0x44] sm:$0xf]
    %v1209 = vld [vmem:[#allocation8 + $0x48] sm:$0xf]
    %v1210 = vld [vmem:[#allocation8 + $0x4c] sm:$0xf]
    %v1211 = vld [vmem:[#allocation8 + $0x50] sm:$0xf]
    %v1212 = vld [vmem:[#allocation8 + $0x54] sm:$0xf]
    %v1213 = vld [vmem:[#allocation8 + $0x58] sm:$0xf]
    %v1214 = vld [vmem:[#allocation8 + $0x5c] sm:$0xf]
    %v1215 = vld [vmem:[#allocation8 + $0x60] sm:$0xf]
    %v1216 = vld [vmem:[#allocation8 + $0x64] sm:$0xf]
    %v1217 = vld [vmem:[#allocation8 + $0x68] sm:$0xf]
    %v1218 = vld [vmem:[#allocation8 + $0x6c] sm:$0xf]
    %v1219 = vld [vmem:[#allocation8 + $0x70] sm:$0xf]
    %v1220 = vld [vmem:[#allocation8 + $0x74] sm:$0xf]
    %v1221 = vld [vmem:[#allocation8 + $0x78] sm:$0xf]
    %v1222 = vld [vmem:[#allocation8 + $0x7c] sm:$0xf]
    %v1223 = vld [vmem:[%s6] sm:$0x1]
    %v1225 = vlaneseq
    %v1226 = vshrl.u32 %v1225, 7
    %v1227 = vsub.s32 0, %v1226
    %v1228 = vrot.slane %v1223, %v1227
    %v1262 = vunpack.c.l.b16 %v1191
    %v1263 = vunpack.c.l.b16 %v1192
    %v1264 = vunpack.c.l.b16 %v1193
    %v1265 = vunpack.c.l.b16 %v1194
    %v1266 = vunpack.c.l.b16 %v1195
    %v1267 = vunpack.c.l.b16 %v1196
    %v1268 = vunpack.c.l.b16 %v1197
    %v1269 = vunpack.c.l.b16 %v1198
    %v1270 = vunpack.c.l.b16 %v1199
    %v1271 = vunpack.c.l.b16 %v1200
    %v1272 = vunpack.c.l.b16 %v1201
    %v1273 = vunpack.c.l.b16 %v1202
    %v1274 = vunpack.c.l.b16 %v1203
    %v1275 = vunpack.c.l.b16 %v1204
    %v1276 = vunpack.c.l.b16 %v1205
    %v1277 = vunpack.c.l.b16 %v1206
    %v1278 = vunpack.c.l.b16 %v1207
    %v1279 = vunpack.c.l.b16 %v1208
    %v1280 = vunpack.c.l.b16 %v1209
    %v1281 = vunpack.c.l.b16 %v1210
    %v1282 = vunpack.c.l.b16 %v1211
    %v1283 = vunpack.c.l.b16 %v1212
    %v1284 = vunpack.c.l.b16 %v1213
    %v1285 = vunpack.c.l.b16 %v1214
    %v1286 = vunpack.c.l.b16 %v1215
    %v1287 = vunpack.c.l.b16 %v1216
    %v1288 = vunpack.c.l.b16 %v1217
    %v1289 = vunpack.c.l.b16 %v1218
    %v1290 = vunpack.c.l.b16 %v1219
    %v1291 = vunpack.c.l.b16 %v1220
    %v1292 = vunpack.c.l.b16 %v1221
    %v1293 = vunpack.c.l.b16 %v1222
    %v1294 = vpack.c.b16 %v1263, %v1262
    %v1295 = vpack.c.b16 %v1265, %v1264
    %v1296 = vpack.c.b16 %v1267, %v1266
    %v1297 = vpack.c.b16 %v1269, %v1268
    %v1298 = vpack.c.b16 %v1271, %v1270
    %v1299 = vpack.c.b16 %v1273, %v1272
    %v1300 = vpack.c.b16 %v1275, %v1274
    %v1301 = vpack.c.b16 %v1277, %v1276
    %v1302 = vpack.c.b16 %v1279, %v1278
    %v1303 = vpack.c.b16 %v1281, %v1280
    %v1304 = vpack.c.b16 %v1283, %v1282
    %v1305 = vpack.c.b16 %v1285, %v1284
    %v1306 = vpack.c.b16 %v1287, %v1286
    %v1307 = vpack.c.b16 %v1289, %v1288
    %v1308 = vpack.c.b16 %v1291, %v1290
    %v1309 = vpack.c.b16 %v1293, %v1292
    %1326 = vmatprep.subr.bf16.mxu0 0
    %1327 = vmatpush1.bf16.msra.mxu0 %v1294
    %1328 = vmatprep.subr.bf16.mxu0 0
    %1329 = vmatpush1.bf16.msra.mxu0 %v1295
    %1330 = vmatprep.subr.bf16.mxu0 0
    %1331 = vmatpush1.bf16.msra.mxu0 %v1296
    %1332 = vmatprep.subr.bf16.mxu0 0
    %1333 = vmatpush1.bf16.msra.mxu0 %v1297
    %1334 = vmatprep.subr.bf16.mxu0 0
    %1335 = vmatpush1.bf16.msra.mxu0 %v1298
    %1336 = vmatprep.subr.bf16.mxu0 0
    %1337 = vmatpush1.bf16.msra.mxu0 %v1299
    %1338 = vmatprep.subr.bf16.mxu0 0
    %1339 = vmatpush1.bf16.msra.mxu0 %v1300
    %1340 = vmatprep.subr.bf16.mxu0 0
    %1341 = vmatpush1.bf16.msra.mxu0 %v1301
    %1342 = vmatprep.subr.bf16.mxu0 0
    %1343 = vmatpush1.bf16.msra.mxu0 %v1302
    %1344 = vmatprep.subr.bf16.mxu0 0
    %1345 = vmatpush1.bf16.msra.mxu0 %v1303
    %1346 = vmatprep.subr.bf16.mxu0 0
    %1347 = vmatpush1.bf16.msra.mxu0 %v1304
    %1348 = vmatprep.subr.bf16.mxu0 0
    %1349 = vmatpush1.bf16.msra.mxu0 %v1305
    %1350 = vmatprep.subr.bf16.mxu0 0
    %1351 = vmatpush1.bf16.msra.mxu0 %v1306
    %1352 = vmatprep.subr.bf16.mxu0 0
    %1353 = vmatpush1.bf16.msra.mxu0 %v1307
    %1354 = vmatprep.subr.bf16.mxu0 0
    %1355 = vmatpush1.bf16.msra.mxu0 %v1308
    %1356 = vmatprep.subr.bf16.mxu0 0
    %1357 = vmatpush1.bf16.msra.mxu0 %v1309
    %1358 = vmatprep.mubr.bf16.mxu0 %v1184
    %1359 = vmatmul.mubr.bf16.gmra.mrb[0].mxu0 %v1183
    %v1360 = vpop.f32.mrb[0].mxu0
    %v1361 = vadd.f32 %v1228, %v1360
    %v1362 = vpop.f32.mrb[0].mxu0
    %v1363 = vpop.f32.mrb[0].mxu0
    %v1364 = vadd.f32 %v1228, %v1363
    %v1365 = vpop.f32.mrb[0].mxu0
    %1366 = vmatprep.mubr.bf16.mxu0 %v1186
    %1367 = vmatmul.mubr.bf16.gmra.mrb[0].mxu0 %v1185
    %v1368 = vpop.f32.mrb[0].mxu0
    %v1369 = vadd.f32 %v1228, %v1368
    %v1370 = vpop.f32.mrb[0].mxu0
    %v1371 = vpop.f32.mrb[0].mxu0
    %v1372 = vadd.f32 %v1228, %v1371
    %v1373 = vpop.f32.mrb[0].mxu0
    %1374 = vmatprep.mubr.bf16.mxu0 %v1188
    %1375 = vmatmul.mubr.bf16.gmra.mrb[0].mxu0 %v1187
    %v1376 = vpop.f32.mrb[0].mxu0
    %v1377 = vadd.f32 %v1228, %v1376
    %v1378 = vpop.f32.mrb[0].mxu0
    %v1379 = vpop.f32.mrb[0].mxu0
    %v1380 = vadd.f32 %v1228, %v1379
    %v1381 = vpop.f32.mrb[0].mxu0
    %1382 = vmatprep.mubr.bf16.mxu0 %v1190
    %1383 = vmatmul.mubr.bf16.gmra.mrb[0].mxu0 %v1189
    %v1384 = vpop.f32.mrb[0].mxu0
    %v1385 = vadd.f32 %v1228, %v1384
    %v1386 = vpop.f32.mrb[0].mxu0
    %v1387 = vpop.f32.mrb[0].mxu0
    %v1388 = vadd.f32 %v1228, %v1387
    %v1389 = vpop.f32.mrb[0].mxu0
    %1390 = vdwg.mxu0
    %1391 = vst [vmem:[#allocation10] sm:$0xff] %v1361
    %1392 = vst [vmem:[#allocation10 + $0x8] sm:$0xff] %v1364
    %1393 = vst [vmem:[#allocation10 + $0x10] sm:$0xff] %v1369
    %1394 = vst [vmem:[#allocation10 + $0x18] sm:$0xff] %v1372
    %1395 = vst [vmem:[#allocation10 + $0x20] sm:$0xff] %v1377
    %1396 = vst [vmem:[#allocation10 + $0x28] sm:$0xff] %v1380
    %1397 = vst [vmem:[#allocation10 + $0x30] sm:$0xff] %v1385
    %1398 = vst [vmem:[#allocation10 + $0x38] sm:$0xff] %v1388
    // Predicated region
    $region46: #{tpu_custom_call.1} parent=1 // pred_check
      _
    $region47: #{tpu_custom_call.1} parent=1 // pred_check_branch
      %1400 = sbr.rel (0) target = $region49
    $region48: #{tpu_custom_call.1} parent=1 // pred_region
      %s1402 = ssub.s32 1024, 1024
      %1403 = vsyncadd [#allocation4], %s1402
      %s1404 = sshll.u32 [#allocation10], 4
      %s1405 = int_to_ptr.vmem [resolvable:$true] %s1404
      %1410 = dma.vmem_to_hbm [thread:$0]  %s1405, 1024, %s7, [#allocation4], 128, 128, 8
    $region49: #{tpu_custom_call.1} parent=1 // pred_fallthru
      _
    // Predicated region
    $region50: #{tpu_custom_call.1} parent=1 // pred_check
      _
    $region51: #{tpu_custom_call.1} parent=1 // pred_check_branch
      %1412 = sbr.rel (0) target = $region53
    $region52: #{tpu_custom_call.1} parent=1 // pred_region
      %1413 = dma.done [#allocation4], 1024
    $region53: #{tpu_custom_call.1} parent=1 // pred_fallthru
      _
    %1414 = vsyncpa [#allocation3], 1
    %1415 = vsyncpa [#allocation6], 1
    %1416 = vsyncpa [#allocation9], 1
    %1417 = vsyncpa [#allocation4], 1

</llo_original>
